<compile_context>
chip_gen: v6e
topology: v6e:2x2x1
jax: 0.10.0
libtpu: 0.0.40
codegen_flags: <defaults>
</compile_context>

<pallas_src>
import functools

import jax
import jax.numpy as jnp
from jax.experimental import pallas as pl
from jax.experimental.pallas import tpu as pltpu


def _round_up(a: int, b: int) -> int:
    return ((a + b - 1) // b) * b


def _sublane_multiple(dtype) -> int:
    # 32-bit -> 8 sublanes, 16-bit -> 16, 8-bit -> 32 (packed dtypes).
    return {4: 8, 2: 16, 1: 32}.get(jnp.dtype(dtype).itemsize, 8)


def _rmsnorm_kernel(x_ref, w_ref, o_ref, *, eps: float):
    # x_ref: (tm, H) tile of tokens; w_ref: (1, H) scale (broadcast over rows).
    x = x_ref[...]
    xf = x.astype(jnp.float32)
    mean_sq = jnp.mean(xf * xf, axis=-1, keepdims=True)     # (tm, 1) f32
    inv_rms = jax.lax.rsqrt(mean_sq + eps)                   # EUP rsqrt
    if jnp.dtype(x.dtype) == jnp.dtype(jnp.float32):
        # f32 path: everything in f32 (exact match to the PyTorch module).
        w = w_ref[...].astype(jnp.float32)                   # (1, H)
        o_ref[...] = (xf * inv_rms * w).astype(o_ref.dtype)
    else:
        # bf16 / packed path: keep the (tm, H) multiplies in the native dtype;
        # only the reduction + rsqrt above run in f32.  Halves f32 temps /
        # vreg pressure on v6e/v7x (native bf16 VPU).
        y = (x * inv_rms.astype(x.dtype)) * w_ref[...].astype(x.dtype)
        o_ref[...] = y.astype(o_ref.dtype)


def _pick_tile_and_vmem(T: int, H: int, dtype):
    """Choose token-tile rows (tm) and a VMEM limit for the pallas_call."""
    itemsize = jnp.dtype(dtype).itemsize
    sub = _sublane_multiple(dtype)

    device_kind = ""
    try:
        device_kind = jax.devices()[0].device_kind.lower()
    except Exception:  # pragma: no cover - defensive; fall back to defaults
        pass
    is_v7 = "v7" in device_kind

    # Per-step DMA target: bigger blocks on v7x (~3.2 TB/s HBM) to keep the
    # fixed ~0.35us per-step overhead amortized; ~2 MiB elsewhere.
    target_block_bytes = (4 << 20) if is_v7 else (2 << 20)
    # VMEM budget: v7x has 64 MiB physical per TC -> cap ~44 MiB; v5e/v6e have
    # 128 MiB physical -> 64 MiB is plenty and well above the scoped default.
    vmem_budget = (44 << 20) if is_v7 else (64 << 20)

    # Conservative VMEM bytes per token row:
    #   double-buffered input + output blocks (native dtype) + ~2 f32 temps.
    per_row_bytes = 4 * H * itemsize + 8 * H

    tm_from_target = max(sub, target_block_bytes // max(1, H * itemsize))
    tm_from_vmem = max(sub, (vmem_budget * 3 // 4) // max(1, per_row_bytes))
    tm = min(tm_from_target, tm_from_vmem, 4096)
    tm = _round_up(tm, sub)
    # Never larger than the (sublane-rounded) token count.
    tm = min(tm, _round_up(T, sub))
    tm = max(tm, sub)

    return tm, vmem_budget, is_v7


def rmsnorm_pallas(x2d, weight, *, eps: float = 1e-6):
    """x2d: [T, H]; weight: [H] -> [T, H]."""
    T, H = x2d.shape
    itemsize = jnp.dtype(x2d.dtype).itemsize
    # TODO(synk): if H is ever not a multiple of 128, stores become masked
    # (vst.msk); pad the lane dim once upstream of this call for peak BW.

    tm, vmem_limit, is_v7 = _pick_tile_and_vmem(T, H, x2d.dtype)
    num_blocks = pl.cdiv(T, tm)          # last block may be partial (masked)

    w2d = weight.reshape(1, H)

    rows_processed = num_blocks * tm
    cost = pl.CostEstimate(
        flops=4 * rows_processed * H,
        transcendentals=rows_processed,
        bytes_accessed=(2 * rows_processed * H * itemsize
                        + num_blocks * H * jnp.dtype(weight.dtype).itemsize),
    )

    if is_v7:
        dim_sem = (pltpu.CORE_PARALLEL,)   # shard token stream across both TCs
    else:
        dim_sem = ("parallel",)

    out = pl.pallas_call(
        functools.partial(_rmsnorm_kernel, eps=eps),
        out_shape=jax.ShapeDtypeStruct((T, H), x2d.dtype),
        grid_spec=pltpu.PrefetchScalarGridSpec(
            num_scalar_prefetch=0,
            grid=(num_blocks,),
            in_specs=[
                pl.BlockSpec((tm, H), lambda i: (i, 0)),   # token tile
                pl.BlockSpec((1, H), lambda i: (0, 0)),    # resident scale
            ],
            out_specs=pl.BlockSpec((tm, H), lambda i: (i, 0)),
        ),
        compiler_params=pltpu.CompilerParams(
            dimension_semantics=dim_sem,
            vmem_limit_bytes=int(vmem_limit),
        ),
        cost_estimate=cost,
    )(x2d, w2d)

    return out


def rmsnorm_forward(x_bsh, weight, *, eps: float = 1e-6):
    """x_bsh: [B, S, H]; weight: [H] (PyTorch RMSNorm layout)."""
    B, S, H = x_bsh.shape
    x2d = x_bsh.reshape(B * S, H)
    out2d = rmsnorm_pallas(x2d, weight, eps=eps)
    return out2d.reshape(B, S, H)


def rmsnorm_reference(x, weight, eps: float = 1e-6):
    # Mirrors the PyTorch module: weight / rms, then x * scaling_factor.
    mean_sq = jnp.mean(jnp.square(x), axis=-1, keepdims=True)
    rms = jnp.sqrt(mean_sq + eps)
    return x * (weight / rms)


if __name__ == "__main__":
    # Small shapes consistent with the module: batch=2, seq=8, hidden=128
    # (lane-aligned last dim for clean TPU tiles).
    B, S, hidden_size = 2, 8, 128
    eps = 1e-6

    key = jax.random.PRNGKey(0)
    kx, kw, kx2 = jax.random.split(key, 3)

    x = jax.random.normal(kx, (B, S, hidden_size), dtype=jnp.float32)
    # PyTorch init is ones; perturb slightly so the scale path is exercised.
    weight = 1.0 + 0.1 * jax.random.normal(kw, (hidden_size,), dtype=jnp.float32)

    out = rmsnorm_forward(x, weight, eps=eps)
    out = jax.block_until_ready(out)

    ref = rmsnorm_reference(x, weight, eps=eps)
    assert out.shape == (B, S, hidden_size)
    assert jnp.allclose(out, ref, atol=1e-5, rtol=1e-5), "mismatch vs reference"

    # Exercise a token count that does NOT divide the tile (partial last block,
    # masked write path — no pad/slice round trip in the wrapper).
    x_odd = jax.random.normal(kx2, (23, hidden_size), dtype=jnp.float32)
    out_odd = jax.block_until_ready(rmsnorm_pallas(x_odd, weight, eps=eps))
    ref_odd = rmsnorm_reference(x_odd, weight, eps=eps)
    assert out_odd.shape == (23, hidden_size)
    assert jnp.allclose(out_odd, ref_odd, atol=1e-5, rtol=1e-5), "partial-block mismatch"

    print("KERNEL_OK")
</pallas_src>

<mosaic_0001>
module attributes {stable_mosaic.version = 11 : i64} {
  func.func @_rmsnorm_kernel(%arg0: i32, %arg1: memref<16x128xf32, #tpu.memory_space<vmem>>, %arg2: memref<1x128xf32, #tpu.memory_space<vmem>>, %arg3: memref<16x128xf32, #tpu.memory_space<vmem>>) attributes {dimension_semantics = [#tpu.dimension_semantics<parallel>], iteration_bounds = array<i64: 1>, scalar_prefetch = 0 : i64, scratch_operands = 0 : i64, tpu.core_type = #tpu.core_type<tc>, window_params = [{transform_indices = @transform_0, window_bounds = array<i64: 16, 128>}, {pipeline_mode = #tpu.pipeline_mode<synchronous>, transform_indices = @transform_1, window_bounds = array<i64: 1, 128>}, {transform_indices = @transform_2, window_bounds = array<i64: 16, 128>}]} {
    %c0 = arith.constant 0 : index
    %c0_0 = arith.constant 0 : index
    %0 = vector.load %arg1[%c0, %c0_0] : memref<16x128xf32, #tpu.memory_space<vmem>>, vector<16x128xf32>
    %1 = arith.mulf %0, %0 : vector<16x128xf32>
    %cst = arith.constant dense<0.000000e+00> : vector<16xf32>
    %2 = vector.multi_reduction <add>, %1, %cst [1] : vector<16x128xf32> to vector<16xf32>
    %3 = vector.shape_cast %2 : vector<16xf32> to vector<16x1xf32>
    %cst_1 = arith.constant 1.280000e+02 : f32
    %4 = vector.broadcast %cst_1 : f32 to vector<16x1xf32>
    %5 = arith.divf %3, %4 : vector<16x1xf32>
    %cst_2 = arith.constant 9.99999997E-7 : f32
    %6 = vector.broadcast %cst_2 : f32 to vector<16x1xf32>
    %7 = arith.addf %5, %6 : vector<16x1xf32>
    %8 = math.rsqrt %7 : vector<16x1xf32>
    %c0_3 = arith.constant 0 : index
    %c0_4 = arith.constant 0 : index
    %9 = vector.load %arg2[%c0_3, %c0_4] : memref<1x128xf32, #tpu.memory_space<vmem>>, vector<1x128xf32>
    %10 = vector.broadcast %8 : vector<16x1xf32> to vector<16x128xf32>
    %11 = arith.mulf %0, %10 : vector<16x128xf32>
    %12 = vector.broadcast %9 : vector<1x128xf32> to vector<16x128xf32>
    %13 = arith.mulf %11, %12 : vector<16x128xf32>
    %c0_5 = arith.constant 0 : index
    %c0_6 = arith.constant 0 : index
    %14 = vector.load %arg3[%c0_5, %c0_6] : memref<16x128xf32, #tpu.memory_space<vmem>>, vector<16x128xf32>
    tpu.vector_store %arg3[%c0_5, %c0_6], %13 {strides = array<i32>} : memref<16x128xf32, #tpu.memory_space<vmem>>, vector<16x128xf32>,
    return
  }
  func.func @transform_0(%arg0: i32) -> (i32, i32) {
    %c0_i32 = arith.constant 0 : i32
    %c0_i32_0 = arith.constant 0 : i32
    return %arg0, %c0_i32 : i32, i32
  }
  func.func @transform_1(%arg0: i32) -> (i32, i32) {
    %c0_i32 = arith.constant 0 : i32
    %c0_i32_0 = arith.constant 0 : i32
    %c0_i32_1 = arith.constant 0 : i32
    return %c0_i32, %c0_i32_0 : i32, i32
  }
  func.func @transform_2(%arg0: i32) -> (i32, i32) {
    %c0_i32 = arith.constant 0 : i32
    %c0_i32_0 = arith.constant 0 : i32
    return %arg0, %c0_i32 : i32, i32
  }
}

</mosaic_0001>

<llo_original>
// kernel: tpu_custom_call.1
$region0: #{tpu_custom_call.1}
  #allocation0 [shape = 'u32[]', space=smem, size = 0x4, offset = 0x4, fixed_abs, tag = 'smem constant byte address 0x4 - core index']
  #allocation1 [shape = 'u32[144,128]{1,0:T(1,128)}', space=vmem, size = 0x12000, scoped, tag = 'internal scratch']
  %s0 = inlined_call_operand.hbm [shape: f32[16,128], index: 0, kind: input, shape index: {}]
  %s1 = inlined_call_operand.vmem [shape: f32[1,128], index: 1, kind: input, shape index: {}]
  %s2 = inlined_call_operand.hbm [shape: f32[16,128], index: 2, kind: output, shape index: {}]
  %s3 = sld [smem:[#allocation0]]
  $region22: #{tpu_custom_call.1} parent=0
    _
  %s5 = ssub.s32 1, %s3
  %s6 = scalar_select 0, %s5, %s3
  $region1: #{tpu_custom_call.1} parent=0
    #allocation2 [shape = 'u8[8192]{0}', space=vmem, size = 0x2000, scoped, tag = 'input window, operand 0, single buffered']
    #allocation3 [shape = 's32[1]{0}', space=sflag, size = 0x4, scoped, tag = 'scoped memory for tpu_custom_call.1']
    #allocation4 [shape = 's32[1]{0}', space=sflag, size = 0x4, scoped, tag = 'scoped memory for tpu_custom_call.1']
    #allocation5 [shape = 'u8[8192]{0}', space=vmem, size = 0x2000, scoped, tag = 'output window, operand 0, single buffered']
    %7 = vsyncpa [#allocation3], 0
    %8 = vsyncpa [#allocation4], 0
    // Predicated region
    $region2: #{tpu_custom_call.1} parent=1 // pred_check
      _
    $region3: #{tpu_custom_call.1} parent=1 // pred_check_branch
      %10 = sbr.rel (0) target = $region5
    $region4: #{tpu_custom_call.1} parent=1 // pred_region
      %s12 = ssub.s32 256, 256
      %13 = vsyncadd [#allocation3], %s12
      %s14 = sshll.u32 [#allocation2], 4
      %s15 = int_to_ptr.vmem [resolvable:$true] %s14
      %20 = dma.hbm_to_vmem [thread:$0]  %s0, 256, %s15, [#allocation3], 128, 128, 8
    $region5: #{tpu_custom_call.1} parent=1 // pred_fallthru
      _
    // Predicated region
    $region6: #{tpu_custom_call.1} parent=1 // pred_check
      _
    $region7: #{tpu_custom_call.1} parent=1 // pred_check_branch
      %22 = sbr.rel (0) target = $region9
    $region8: #{tpu_custom_call.1} parent=1 // pred_region
      _
    $region9: #{tpu_custom_call.1} parent=1 // pred_fallthru
      _
    // Predicated region
    $region10: #{tpu_custom_call.1} parent=1 // pred_check
      _
    $region11: #{tpu_custom_call.1} parent=1 // pred_check_branch
      %24 = sbr.rel (0) target = $region13
    $region12: #{tpu_custom_call.1} parent=1 // pred_region
      %25 = dma.done [#allocation3], 256
    $region13: #{tpu_custom_call.1} parent=1 // pred_fallthru
      _
    %v26 = vld [vmem:[#allocation2] sm:$0xff]
    %v27 = vld [vmem:[#allocation2 + $0x8] sm:$0xff]
    %v28 = vmul.f32 %v26, %v26
    %v29 = vmul.f32 %v27, %v27
    %30 = vadd.xlane.f32.xlu0 %v28
    %v31 = vpop.xlane.xlu0 %30
    %32 = vadd.xlane.f32.xlu0 %v29
    %v33 = vpop.xlane.xlu0 %32
    %v34 = vrcp.pop 128.0
    %v35 = vmul.f32 %v31, %v34
    %v36 = vmul.f32 %v33, %v34
    %v37 = vadd.f32 %v35, 1e-06
    %v38 = vadd.f32 %v36, 1e-06
    %v39 = vrsqrt.pop %v37
    %v40 = vrsqrt.pop %v38
    %v41 = vld [vmem:[%s1] sm:$0x1]
    %v42 = vmul.f32 %v26, %v39
    %v43 = vmul.f32 %v27, %v40
    %v45 = vlaneseq
    %v46 = vshrl.u32 %v45, 7
    %v47 = vsub.s32 0, %v46
    %v48 = vrot.slane %v41, %v47
    %v50 = vmul.f32 %v42, %v48
    %v51 = vmul.f32 %v43, %v48
    %52 = vst [vmem:[#allocation5] sm:$0xff] %v50
    %53 = vst [vmem:[#allocation5 + $0x8] sm:$0xff] %v51
    // Predicated region
    $region14: #{tpu_custom_call.1} parent=1 // pred_check
      _
    $region15: #{tpu_custom_call.1} parent=1 // pred_check_branch
      %55 = sbr.rel (0) target = $region17
    $region16: #{tpu_custom_call.1} parent=1 // pred_region
      %s57 = ssub.s32 256, 256
      %58 = vsyncadd [#allocation4], %s57
      %s59 = sshll.u32 [#allocation5], 4
      %s60 = int_to_ptr.vmem [resolvable:$true] %s59
      %65 = dma.vmem_to_hbm [thread:$0]  %s60, 256, %s2, [#allocation4], 128, 128, 8
    $region17: #{tpu_custom_call.1} parent=1 // pred_fallthru
      _
    // Predicated region
    $region18: #{tpu_custom_call.1} parent=1 // pred_check
      _
    $region19: #{tpu_custom_call.1} parent=1 // pred_check_branch
      %67 = sbr.rel (0) target = $region21
    $region20: #{tpu_custom_call.1} parent=1 // pred_region
      %68 = dma.done [#allocation4], 256
    $region21: #{tpu_custom_call.1} parent=1 // pred_fallthru
      _
    %69 = vsyncpa [#allocation3], 1
    %70 = vsyncpa [#allocation4], 1

</llo_original>
